<compile_context>
chip_gen: v5e
topology: v5e:2x2
jax: 0.10.0
libtpu: 0.0.40
codegen_flags: <defaults>
</compile_context>

<pallas_src>
import functools

import jax
import jax.numpy as jnp
import numpy as np
from jax.experimental import pallas as pl
from jax.experimental.pallas import tpu as pltpu

_NEG_BIG = -1e30  # finite "minus infinity" (avoids inf-inf NaNs on empty rows)


def _pick_kc(K, max_kc=1024):
    """Largest K-chunk (<= max_kc, multiple of 128) that divides K."""
    if K <= max_kc:
        return K
    for kc in range(max_kc, 127, -128):
        if K % kc == 0:
            return kc
    # TODO(synk): for awkward K (no 128-multiple divisor) fall back to a
    # single whole-K chunk; a masked remainder chunk would be the real fix.
    return K


def _circle_loss_kernel(mat_ref, mask_ref, loss_ref, *, gamma, m, n_rows,
                        row_block, k_chunk, num_chunks, mask_rows):
    op = 1.0 + m
    on = -m
    delta_p = 1.0 - m
    delta_n = m

    if mask_rows:
        # Ragged last row-tile: garbage rows (stale VMEM) must not contribute.
        row0 = pl.program_id(0) * row_block
        row_ids = jax.lax.broadcasted_iota(jnp.int32, (row_block, 1), 0)
        row_ok = (row0 + row_ids) < n_rows            # (TB, 1) bool
    else:
        row_ok = None

    def chunk_stats(s, mbits, m_p, l_p, m_n, l_n):
        # s: (TB, KC) f32, mbits: (TB, KC) int8; carries are (TB, 1) f32.
        mb = mbits.astype(jnp.int32)
        pos = (mb & 1) != 0
        neg = (mb & 2) != 0
        if row_ok is not None:
            pos = jnp.logical_and(pos, row_ok)
            neg = jnp.logical_and(neg, row_ok)

        # per-element circle-loss logits (VPU elementwise)
        eq_sp = (-gamma) * jnp.maximum(op - s, 0.0) * (s - delta_p)
        eq_sn = gamma * jnp.maximum(s - on, 0.0) * (s - delta_n)

        sp = jnp.where(pos, eq_sp, _NEG_BIG)
        sn = jnp.where(neg, eq_sn, _NEG_BIG)

        # online (flash-style) max update
        m_p_new = jnp.maximum(m_p, jnp.max(sp, axis=1, keepdims=True))
        m_n_new = jnp.maximum(m_n, jnp.max(sn, axis=1, keepdims=True))

        # ONE exp per element: masks are disjoint, so combine the shifted
        # logits first, exponentiate once, then split with masked sums.
        z = jnp.where(pos, eq_sp - m_p_new,
                      jnp.where(neg, eq_sn - m_n_new, _NEG_BIG))
        e = jnp.exp(z)                                  # 0 where neither mask
        p_chunk = jnp.sum(jnp.where(pos, e, 0.0), axis=1, keepdims=True)
        n_chunk = jnp.sum(jnp.where(neg, e, 0.0), axis=1, keepdims=True)

        l_p = l_p * jnp.exp(m_p - m_p_new) + p_chunk
        l_n = l_n * jnp.exp(m_n - m_n_new) + n_chunk
        return m_p_new, l_p, m_n_new, l_n

    shape1 = (row_block, 1)
    init = (jnp.full(shape1, _NEG_BIG, jnp.float32),
            jnp.zeros(shape1, jnp.float32),
            jnp.full(shape1, _NEG_BIG, jnp.float32),
            jnp.zeros(shape1, jnp.float32))

    if num_chunks == 1:
        m_p, l_p, m_n, l_n = chunk_stats(
            mat_ref[...].astype(jnp.float32), mask_ref[...], *init)
    else:
        def body(c, carry):
            off = pl.multiple_of(c * k_chunk, k_chunk)
            s = mat_ref[:, pl.ds(off, k_chunk)].astype(jnp.float32)
            mbits = mask_ref[:, pl.ds(off, k_chunk)]
            return chunk_stats(s, mbits, *carry)
        m_p, l_p, m_n, l_n = jax.lax.fori_loop(
            0, num_chunks, body, init, unroll=(num_chunks <= 8))

    # loss = log(1 + P*N) with P = exp(m_p)*l_p, N = exp(m_n)*l_n
    #      = softplus(a),  a = m_p + m_n + log(l_p) + log(l_n)
    # Empty rows give a = -inf -> loss 0 (no NaN path: -1e30 - (-1e30) = 0).
    a = m_p + m_n + jnp.log(l_p) + jnp.log(l_n)
    loss = jnp.maximum(a, 0.0) + jnp.log(1.0 + jnp.exp(-jnp.abs(a)))
    # TODO(synk): optional lane-dense output ((num_tiles, TB) with a (TB,1)
    # -> (1,TB) relayout) would replace the masked vst.msk epilogue stores;
    # skipped here since output traffic is ~1/(K) of the input traffic.
    loss_ref[...] = loss


def circle_loss(mat, pos_mask=None, neg_mask=None, *, gamma, m,
                row_tile=None, packed_mask=None):
    """mat: [B, K] similarities (f32 or bf16); pos/neg masks: [B, K] (nonzero =
    selected, disjoint per element). Alternatively pass `packed_mask` int8
    with bit0=pos, bit1=neg to skip the wrapper-side packing pass.

    Returns loss: [B] float32.
    """
    B, K = mat.shape
    if mat.dtype not in (jnp.float32, jnp.bfloat16):
        mat = mat.astype(jnp.float32)

    if packed_mask is None:
        # Single fused XLA pass producing ONE int8 stream for the kernel.
        pos_b = jnp.asarray(pos_mask) != 0
        neg_b = jnp.asarray(neg_mask) != 0
        packed_mask = pos_b.astype(jnp.int8) + 2 * neg_b.astype(jnp.int8)
    else:
        packed_mask = jnp.asarray(packed_mask).astype(jnp.int8)

    KC = _pick_kc(K)
    num_chunks = K // KC

    if row_tile is None:
        # VMEM budget: double-buffered inputs (mat + packed mask) plus ~8
        # chunk-sized f32 temporaries, kept near 12 MiB (fits the v5e 16 MiB
        # scoped default even without the explicit 32 MiB limit below).
        mat_bytes = jnp.dtype(mat.dtype).itemsize
        per_row = 2 * K * (mat_bytes + 1) + 8 * 4 * KC
        budget = 12 * 1024 * 1024
        row_tile = max(32, min(1024, (budget // per_row) // 32 * 32))
        # v7x megacore: guarantee >= 2 grid steps when B is big enough to
        # split, so the "parallel" axis actually shards across both TCs.
        if B > 64:
            half = (((B + 1) // 2) + 31) // 32 * 32
            row_tile = min(row_tile, max(64, half))

    if B <= row_tile:
        TB = B                                   # single tile, block == full dims
    else:
        TB = max(32, (row_tile // 32) * 32)      # int8 sublane-friendly tile
    num_tiles = pl.cdiv(B, TB)
    mask_rows = (num_tiles * TB) != B            # ragged last tile -> mask rows

    kernel = functools.partial(
        _circle_loss_kernel, gamma=float(gamma), m=float(m), n_rows=B,
        row_block=TB, k_chunk=KC, num_chunks=num_chunks, mask_rows=mask_rows)

    out = pl.pallas_call(
        kernel,
        out_shape=jax.ShapeDtypeStruct((B, 1), jnp.float32),
        grid=(num_tiles,),
        in_specs=[
            pl.BlockSpec((TB, K), lambda i: (i, 0)),   # mat (f32/bf16)
            pl.BlockSpec((TB, K), lambda i: (i, 0)),   # packed int8 mask
        ],
        out_specs=pl.BlockSpec((TB, 1), lambda i: (i, 0)),
        compiler_params=pltpu.CompilerParams(
            dimension_semantics=("parallel",),
            vmem_limit_bytes=32 * 1024 * 1024),
    )(mat, packed_mask)
    return out[:, 0]


def _reference(mat, pos_mask, neg_mask, gamma, m):
    """Float64 numpy mirror of the PyTorch loop (gather + N x M cross sum)."""
    mat = np.asarray(mat, np.float64)
    pos = np.asarray(pos_mask).astype(bool)
    neg = np.asarray(neg_mask).astype(bool)
    B = mat.shape[0]
    op, on = 1.0 + m, -m
    delta_p, delta_n = 1.0 - m, m
    ap = mat[pos].reshape(B, -1)
    an = mat[neg].reshape(B, -1)
    eq_sp = -gamma * np.maximum(op - ap, 0.0) * (ap - delta_p)
    eq_sn = gamma * np.maximum(an - on, 0.0) * (an - delta_n)
    loss = np.zeros(B, np.float64)
    for i in range(B):
        cross = eq_sp[i][:, None] + eq_sn[i][None, :]
        loss[i] = np.log(1.0 + np.exp(cross).sum())
    return loss.astype(np.float32)


def _make_masks(key, B, K, n_pos):
    """Exactly n_pos positives per row at random positions; rest negatives."""
    scores = jax.random.uniform(key, (B, K))
    order = jnp.argsort(scores, axis=1)
    ranks = jnp.argsort(order, axis=1)
    pos = (ranks < n_pos).astype(jnp.float32)
    neg = 1.0 - pos
    return pos, neg


def _run_case(key, B, K, n_pos, gamma, m, row_tile=None):
    k_mat, k_mask = jax.random.split(key)
    mat = jax.random.uniform(k_mat, (B, K), dtype=jnp.float32)
    pos_mask, neg_mask = _make_masks(k_mask, B, K, n_pos)

    loss = circle_loss(mat, pos_mask, neg_mask, gamma=gamma, m=m,
                       row_tile=row_tile)
    loss = jax.block_until_ready(loss)

    ref = _reference(mat, pos_mask, neg_mask, gamma, m)
    np.testing.assert_allclose(np.asarray(loss), ref, rtol=1e-4, atol=1e-3)


if __name__ == "__main__":
    key = jax.random.PRNGKey(0)
    k1, k2, k3 = jax.random.split(key, 3)

    # Case 1: tiny shape from the module driver, realistic gamma (exercises
    # the log-sum-exp stabilization; the naive form would overflow f32).
    _run_case(k1, B=8, K=128, n_pos=32, gamma=80.0, m=0.25)

    # Case 2: multi-tile + ragged-B path — B=80 rows with row_tile=32
    # (grid of 3 row tiles, last tile partially out of bounds, in-kernel
    # row masking; no wrapper-side padding copies), K=256.
    _run_case(k2, B=80, K=256, n_pos=64, gamma=64.0, m=0.4, row_tile=32)

    # Case 3: wide-K path — K=2048 exercises the K-chunked online LSE
    # (two 1024-lane chunks inside the kernel).
    _run_case(k3, B=16, K=2048, n_pos=256, gamma=96.0, m=0.3)

    # TODO(synk): add a K % 128 != 0 case (e.g. K=200) once padded-lane
    # masking of axis=-1 reductions is validated on the target Mosaic build.
    print("KERNEL_OK")
</pallas_src>

<mosaic_0001>
module attributes {stable_mosaic.version = 11 : i64} {
  func.func @_circle_loss_kernel(%arg0: i32, %arg1: memref<8x128xf32, #tpu.memory_space<vmem>>, %arg2: memref<8x128xi8, #tpu.memory_space<vmem>>, %arg3: memref<8x1xf32, #tpu.memory_space<vmem>>) attributes {dimension_semantics = [#tpu.dimension_semantics<parallel>], iteration_bounds = array<i64: 1>, scalar_prefetch = 0 : i64, scratch_operands = 0 : i64, tpu.core_type = #tpu.core_type<tc>, window_params = [{transform_indices = @transform_0, window_bounds = array<i64: 8, 128>}, {transform_indices = @transform_1, window_bounds = array<i64: 8, 128>}, {transform_indices = @transform_2, window_bounds = array<i64: 8, 1>}]} {
    %cst = arith.constant -1.000000e+30 : f32
    %0 = vector.broadcast %cst : f32 to vector<8x1xf32>
    %cst_0 = arith.constant 0.000000e+00 : f32
    %1 = vector.broadcast %cst_0 : f32 to vector<8x1xf32>
    %cst_1 = arith.constant -1.000000e+30 : f32
    %2 = vector.broadcast %cst_1 : f32 to vector<8x1xf32>
    %cst_2 = arith.constant 0.000000e+00 : f32
    %3 = vector.broadcast %cst_2 : f32 to vector<8x1xf32>
    %c0 = arith.constant 0 : index
    %c0_3 = arith.constant 0 : index
    %4 = vector.load %arg1[%c0, %c0_3] : memref<8x128xf32, #tpu.memory_space<vmem>>, vector<8x128xf32>
    %c0_4 = arith.constant 0 : index
    %c0_5 = arith.constant 0 : index
    %5 = vector.load %arg2[%c0_4, %c0_5] : memref<8x128xi8, #tpu.memory_space<vmem>>, vector<8x128xi8>
    %6 = arith.extsi %5 : vector<8x128xi8> to vector<8x128xi32>
    %c1_i32 = arith.constant 1 : i32
    %7 = vector.broadcast %c1_i32 : i32 to vector<8x128xi32>
    %8 = arith.andi %6, %7 : vector<8x128xi32>
    %c0_i32 = arith.constant 0 : i32
    %9 = vector.broadcast %c0_i32 : i32 to vector<8x128xi32>
    %10 = arith.cmpi ne, %8, %9 : vector<8x128xi32>
    %c2_i32 = arith.constant 2 : i32
    %11 = vector.broadcast %c2_i32 : i32 to vector<8x128xi32>
    %12 = arith.andi %6, %11 : vector<8x128xi32>
    %c0_i32_6 = arith.constant 0 : i32
    %13 = vector.broadcast %c0_i32_6 : i32 to vector<8x128xi32>
    %14 = arith.cmpi ne, %12, %13 : vector<8x128xi32>
    %cst_7 = arith.constant 1.250000e+00 : f32
    %15 = vector.broadcast %cst_7 : f32 to vector<8x128xf32>
    %16 = arith.subf %15, %4 : vector<8x128xf32>
    %cst_8 = arith.constant 0.000000e+00 : f32
    %17 = vector.broadcast %cst_8 : f32 to vector<8x128xf32>
    %18 = arith.maximumf %16, %17 : vector<8x128xf32>
    %cst_9 = arith.constant -8.000000e+01 : f32
    %19 = vector.broadcast %cst_9 : f32 to vector<8x128xf32>
    %20 = arith.mulf %19, %18 : vector<8x128xf32>
    %cst_10 = arith.constant 7.500000e-01 : f32
    %21 = vector.broadcast %cst_10 : f32 to vector<8x128xf32>
    %22 = arith.subf %4, %21 : vector<8x128xf32>
    %23 = arith.mulf %20, %22 : vector<8x128xf32>
    %cst_11 = arith.constant -2.500000e-01 : f32
    %24 = vector.broadcast %cst_11 : f32 to vector<8x128xf32>
    %25 = arith.subf %4, %24 : vector<8x128xf32>
    %cst_12 = arith.constant 0.000000e+00 : f32
    %26 = vector.broadcast %cst_12 : f32 to vector<8x128xf32>
    %27 = arith.maximumf %25, %26 : vector<8x128xf32>
    %cst_13 = arith.constant 8.000000e+01 : f32
    %28 = vector.broadcast %cst_13 : f32 to vector<8x128xf32>
    %29 = arith.mulf %28, %27 : vector<8x128xf32>
    %cst_14 = arith.constant 2.500000e-01 : f32
    %30 = vector.broadcast %cst_14 : f32 to vector<8x128xf32>
    %31 = arith.subf %4, %30 : vector<8x128xf32>
    %32 = arith.mulf %29, %31 : vector<8x128xf32>
    %cst_15 = arith.constant -1.000000e+30 : f32
    %33 = vector.broadcast %cst_15 : f32 to vector<8x128xf32>
    %34 = arith.select %10, %23, %33 : vector<8x128xi1>, vector<8x128xf32>
    %cst_16 = arith.constant -1.000000e+30 : f32
    %35 = vector.broadcast %cst_16 : f32 to vector<8x128xf32>
    %36 = arith.select %14, %32, %35 : vector<8x128xi1>, vector<8x128xf32>
    %cst_17 = arith.constant dense<0xFF800000> : vector<8xf32>
    %37 = vector.multi_reduction <maximumf>, %34, %cst_17 [1] : vector<8x128xf32> to vector<8xf32>
    %38 = vector.shape_cast %37 : vector<8xf32> to vector<8x1xf32>
    %39 = arith.maximumf %0, %38 : vector<8x1xf32>
    %cst_18 = arith.constant dense<0xFF800000> : vector<8xf32>
    %40 = vector.multi_reduction <maximumf>, %36, %cst_18 [1] : vector<8x128xf32> to vector<8xf32>
    %41 = vector.shape_cast %40 : vector<8xf32> to vector<8x1xf32>
    %42 = arith.maximumf %2, %41 : vector<8x1xf32>
    %43 = vector.broadcast %39 : vector<8x1xf32> to vector<8x128xf32>
    %44 = arith.subf %23, %43 : vector<8x128xf32>
    %45 = vector.broadcast %42 : vector<8x1xf32> to vector<8x128xf32>
    %46 = arith.subf %32, %45 : vector<8x128xf32>
    %cst_19 = arith.constant -1.000000e+30 : f32
    %47 = vector.broadcast %cst_19 : f32 to vector<8x128xf32>
    %48 = arith.select %14, %46, %47 : vector<8x128xi1>, vector<8x128xf32>
    %49 = arith.select %10, %44, %48 : vector<8x128xi1>, vector<8x128xf32>
    %50 = math.exp %49 : vector<8x128xf32>
    %cst_20 = arith.constant 0.000000e+00 : f32
    %51 = vector.broadcast %cst_20 : f32 to vector<8x128xf32>
    %52 = arith.select %10, %50, %51 : vector<8x128xi1>, vector<8x128xf32>
    %cst_21 = arith.constant dense<0.000000e+00> : vector<8xf32>
    %53 = vector.multi_reduction <add>, %52, %cst_21 [1] : vector<8x128xf32> to vector<8xf32>
    %54 = vector.shape_cast %53 : vector<8xf32> to vector<8x1xf32>
    %cst_22 = arith.constant 0.000000e+00 : f32
    %55 = vector.broadcast %cst_22 : f32 to vector<8x128xf32>
    %56 = arith.select %14, %50, %55 : vector<8x128xi1>, vector<8x128xf32>
    %cst_23 = arith.constant dense<0.000000e+00> : vector<8xf32>
    %57 = vector.multi_reduction <add>, %56, %cst_23 [1] : vector<8x128xf32> to vector<8xf32>
    %58 = vector.shape_cast %57 : vector<8xf32> to vector<8x1xf32>
    %59 = arith.subf %0, %39 : vector<8x1xf32>
    %60 = math.exp %59 : vector<8x1xf32>
    %61 = arith.mulf %1, %60 : vector<8x1xf32>
    %62 = arith.addf %61, %54 : vector<8x1xf32>
    %63 = arith.subf %2, %42 : vector<8x1xf32>
    %64 = math.exp %63 : vector<8x1xf32>
    %65 = arith.mulf %3, %64 : vector<8x1xf32>
    %66 = arith.addf %65, %58 : vector<8x1xf32>
    %67 = arith.addf %39, %42 : vector<8x1xf32>
    %68 = math.log %62 : vector<8x1xf32>
    %69 = arith.addf %67, %68 : vector<8x1xf32>
    %70 = math.log %66 : vector<8x1xf32>
    %71 = arith.addf %69, %70 : vector<8x1xf32>
    %cst_24 = arith.constant 0.000000e+00 : f32
    %72 = vector.broadcast %cst_24 : f32 to vector<8x1xf32>
    %73 = arith.maximumf %71, %72 : vector<8x1xf32>
    %74 = math.absf %71 : vector<8x1xf32>
    %cst_25 = arith.constant 0.000000e+00 : f32
    %75 = vector.broadcast %cst_25 : f32 to vector<8x1xf32>
    %76 = arith.subf %75, %74 : vector<8x1xf32>
    %77 = math.exp %76 : vector<8x1xf32>
    %cst_26 = arith.constant 1.000000e+00 : f32
    %78 = vector.broadcast %cst_26 : f32 to vector<8x1xf32>
    %79 = arith.addf %78, %77 : vector<8x1xf32>
    %80 = math.log %79 : vector<8x1xf32>
    %81 = arith.addf %73, %80 : vector<8x1xf32>
    %c0_27 = arith.constant 0 : index
    %c0_28 = arith.constant 0 : index
    %82 = vector.load %arg3[%c0_27, %c0_28] : memref<8x1xf32, #tpu.memory_space<vmem>>, vector<8x1xf32>
    tpu.vector_store %arg3[%c0_27, %c0_28], %81 {strides = array<i32>} : memref<8x1xf32, #tpu.memory_space<vmem>>, vector<8x1xf32>,
    return
  }
  func.func @transform_0(%arg0: i32) -> (i32, i32) {
    %c0_i32 = arith.constant 0 : i32
    %c0_i32_0 = arith.constant 0 : i32
    return %arg0, %c0_i32 : i32, i32
  }
  func.func @transform_1(%arg0: i32) -> (i32, i32) {
    %c0_i32 = arith.constant 0 : i32
    %c0_i32_0 = arith.constant 0 : i32
    return %arg0, %c0_i32 : i32, i32
  }
  func.func @transform_2(%arg0: i32) -> (i32, i32) {
    %c0_i32 = arith.constant 0 : i32
    %c0_i32_0 = arith.constant 0 : i32
    return %arg0, %c0_i32 : i32, i32
  }
}

</mosaic_0001>

<llo_original>
// kernel: tpu_custom_call.1
$region0: #{tpu_custom_call.1}
  #allocation0 [shape = 'u32[]', space=smem, size = 0x4, offset = 0x4, fixed_abs, tag = 'smem constant byte address 0x4 - core index']
  #allocation1 [shape = 'u32[72,128]{1,0:T(1,128)}', space=vmem, size = 0x9000, scoped, tag = 'internal scratch']
  %s0 = inlined_call_operand.hbm [shape: f32[8,128], index: 0, kind: input, shape index: {}]
  %s1 = inlined_call_operand.hbm [shape: s8[8,128], index: 1, kind: input, shape index: {}]
  %s2 = inlined_call_operand.vmem [shape: f32[8,1], index: 2, kind: output, shape index: {}]
  %s3 = sld [smem:[#allocation0]]
  $region26: #{tpu_custom_call.1} parent=0
    _
  %s5 = ssub.s32 1, %s3
  %s6 = scalar_select 0, %s5, %s3
  $region1: #{tpu_custom_call.1} parent=0
    #allocation2 [shape = 'u8[4096]{0}', space=vmem, size = 0x1000, scoped, tag = 'input window, operand 0, single buffered']
    #allocation3 [shape = 's32[1]{0}', space=sflag, size = 0x4, scoped, tag = 'scoped memory for tpu_custom_call.1']
    #allocation4 [shape = 'u8[1024]{0}', space=vmem, size = 0x400, scoped, tag = 'input window, operand 1, single buffered']
    #allocation5 [shape = 's32[1]{0}', space=sflag, size = 0x4, scoped, tag = 'scoped memory for tpu_custom_call.1']
    %7 = vsyncpa [#allocation3], 0
    %8 = vsyncpa [#allocation5], 0
    // Predicated region
    $region2: #{tpu_custom_call.1} parent=1 // pred_check
      _
    $region3: #{tpu_custom_call.1} parent=1 // pred_check_branch
      %10 = sbr.rel (0) target = $region5
    $region4: #{tpu_custom_call.1} parent=1 // pred_region
      %12 = vsyncadd [#allocation3], 0
      %s14 = sshll.u32 %s0, 4
      %s15 = int_to_ptr.hbm [resolvable:$true] %s14
      %s16 = sshll.u32 [#allocation2], 4
      %s17 = int_to_ptr.vmem [resolvable:$true] %s16
      %19 = dma.hbm_to_vmem [thread:$0]  %s15, 128, %s17, [#allocation3]
    $region5: #{tpu_custom_call.1} parent=1 // pred_fallthru
      _
    // Predicated region
    $region6: #{tpu_custom_call.1} parent=1 // pred_check
      _
    $region7: #{tpu_custom_call.1} parent=1 // pred_check_branch
      %21 = sbr.rel (0) target = $region9
    $region8: #{tpu_custom_call.1} parent=1 // pred_region
      %23 = vsyncadd [#allocation5], 0
      %s25 = sshll.u32 %s1, 4
      %s26 = int_to_ptr.hbm [resolvable:$true] %s25
      %s27 = sshll.u32 [#allocation4], 4
      %s28 = int_to_ptr.vmem [resolvable:$true] %s27
      %30 = dma.hbm_to_vmem [thread:$0]  %s26, 32, %s28, [#allocation5]
    $region9: #{tpu_custom_call.1} parent=1 // pred_fallthru
      _
    // Predicated region
    $region10: #{tpu_custom_call.1} parent=1 // pred_check
      _
    $region11: #{tpu_custom_call.1} parent=1 // pred_check_branch
      %32 = sbr.rel (0) target = $region13
    $region12: #{tpu_custom_call.1} parent=1 // pred_region
      %34 = dma.done [#allocation3], 128
    $region13: #{tpu_custom_call.1} parent=1 // pred_fallthru
      _
    // Predicated region
    $region14: #{tpu_custom_call.1} parent=1 // pred_check
      _
    $region15: #{tpu_custom_call.1} parent=1 // pred_check_branch
      %36 = sbr.rel (0) target = $region17
    $region16: #{tpu_custom_call.1} parent=1 // pred_region
      %38 = dma.done [#allocation5], 32
    $region17: #{tpu_custom_call.1} parent=1 // pred_fallthru
      _
    %v39 = vld [vmem:[#allocation2] sm:$0xff]
    %v40 = vld [vmem:[#allocation4] sm:$0x3]
    %v41 = vunpack.c.0.s8 %v40
    %v42 = vand.u32 %v41, 1
    %vm43 = vcmp.ne.s32.totalorder %v42, 0
    %v44 = vand.u32 %v41, 2
    %vm45 = vcmp.ne.s32.totalorder %v44, 0
    %v46 = vsub.f32 1.25, %v39
    %v47 = vmax.f32 %v46, 0.0
    %v48 = vmul.f32 %v47, -80.0
    %v49 = vsub.f32 %v39, 0.75
    %v50 = vmul.f32 %v48, %v49
    %v51 = vsub.f32 %v39, -0.25
    %v52 = vmax.f32 %v51, 0.0
    %v53 = vmul.f32 %v52, 80.0
    %v54 = vsub.f32 %v39, 0.25
    %v55 = vmul.f32 %v53, %v54
    %v56 = vsel %vm43, %v50, -1e+30
    %v57 = vsel %vm45, %v55, -1e+30
    %58 = vmax.xlane.f32.xlu0 %v56
    %v59 = vpop.xlane.xlu0 %58
    %v60 = vmax.f32 %v59, -1e+30
    %61 = vmax.xlane.f32.xlu0 %v57
    %v62 = vpop.xlane.xlu0 %61
    %v63 = vmax.f32 %v62, -1e+30
    %v64 = vsub.f32 %v50, %v60
    %v65 = vsub.f32 %v55, %v63
    %v66 = vsel %vm45, %v65, -1e+30
    %v67 = vsel %vm43, %v64, %v66
    %v68 = vmul.f32 %v67, 1.442695
    %v69 = vpow.pop %v68
    %v70 = vsel %vm43, %v69, 0.0
    %71 = vadd.xlane.f32.xlu0 %v70
    %v72 = vpop.xlane.xlu0 %71
    %v73 = vsel %vm45, %v69, 0.0
    %74 = vadd.xlane.f32.xlu0 %v73
    %v75 = vpop.xlane.xlu0 %74
    %v76 = vsub.f32 -1e+30, %v60
    %v77 = vmul.f32 %v76, 1.442695
    %v78 = vpow.pop %v77
    %v79 = vmul.f32 %v78, 0.0
    %v80 = vadd.f32 %v79, %v72
    %v81 = vsub.f32 -1e+30, %v63
    %v82 = vmul.f32 %v81, 1.442695
    %v83 = vpow.pop %v82
    %v84 = vmul.f32 %v83, 0.0
    %v85 = vadd.f32 %v84, %v75
    %v86 = vadd.f32 %v60, %v63
    %v87 = vlog2.pop %v80
    %v88 = vmul.f32 %v87, 0.6931472
    %v89 = vadd.f32 %v86, %v88
    %v90 = vlog2.pop %v85
    %v91 = vmul.f32 %v90, 0.6931472
    %v92 = vadd.f32 %v89, %v91
    %v93 = vmax.f32 %v92, 0.0
    %v94 = vand.u32 2147483647, %v92
    %v95 = vsub.f32 0.0, %v94
    %v96 = vmul.f32 %v95, 1.442695
    %v97 = vpow.pop %v96
    %v98 = vadd.f32 %v97, 1.0
    %v99 = vlog2.pop %v98
    %v100 = vmul.f32 %v99, 0.6931472
    %v101 = vadd.f32 %v93, %v100
    %vm102 = vcmask 7168
    %103 = vst.msk [vmem:[%s2] sm:$0xff] %vm102, %v101
    // Predicated region
    $region18: #{tpu_custom_call.1} parent=1 // pred_check
      _
    $region19: #{tpu_custom_call.1} parent=1 // pred_check_branch
      %105 = sbr.rel (0) target = $region21
    $region20: #{tpu_custom_call.1} parent=1 // pred_region
      _
    $region21: #{tpu_custom_call.1} parent=1 // pred_fallthru
      _
    // Predicated region
    $region22: #{tpu_custom_call.1} parent=1 // pred_check
      _
    $region23: #{tpu_custom_call.1} parent=1 // pred_check_branch
      %107 = sbr.rel (0) target = $region25
    $region24: #{tpu_custom_call.1} parent=1 // pred_region
      _
    $region25: #{tpu_custom_call.1} parent=1 // pred_fallthru
      _
    %108 = vsyncpa [#allocation3], 1
    %109 = vsyncpa [#allocation5], 1

</llo_original>
